<compile_context>
chip_gen: v5e
topology: v5e:2x2
jax: 0.10.0
libtpu: 0.0.40
codegen_flags: <defaults>
</compile_context>

<pallas_src>
import jax
import jax.numpy as jnp
from jax import lax
from jax.experimental import pallas as pl
from jax.experimental.pallas import tpu as pltpu


def _make_kernel(H):
    def kernel(x_ref, scale_ref, shift_ref, w_ref, b_ref, o_ref):
        # x_ref:     (Nb*H, W*Cin)      f32 input rows (batch*height flattened), lanes = W*Cin
        # scale_ref: (1, W*Cin)         BN scale = gamma/sqrt(var+eps), tiled across W
        # shift_ref: (1, W*Cin)         BN shift = beta - mean*scale,  tiled across W
        # w_ref:     (3, W*Cin, W*Cout) bf16 banded spectral-normalized weights, one per ky
        # b_ref:     (1, W*Cout)        conv bias tiled across W
        # o_ref:     (Nb*H, W*Cout)     f32 output, lane-dense
        # BN affine + ReLU on the VPU, single cast to bf16 for the MXU.
        act = jnp.maximum(x_ref[...] * scale_ref[...] + shift_ref[...], 0.0)
        act_bf = act.astype(jnp.bfloat16)

        # One matmul per kernel row ky; x-direction zero padding is already encoded in
        # the banded weights (edge taps are zero), so no column halo is needed.
        p0 = jnp.dot(act_bf, w_ref[0], preferred_element_type=jnp.float32)
        p1 = jnp.dot(act_bf, w_ref[1], preferred_element_type=jnp.float32)
        p2 = jnp.dot(act_bf, w_ref[2], preferred_element_type=jnp.float32)

        # y-direction: out[h] = bias + P1[h] + P0[h-1] + P2[h+1], zero outside [0, H).
        # Row shifts happen on the lane-dense OUTPUT; the per-row masks also stop rows
        # from bleeding across the Nb batch elements stacked inside this block.
        mb, wcout = p1.shape
        zrow = jnp.zeros((1, wcout), jnp.float32)
        p0_dn = jnp.concatenate([zrow, p0[:mb - 1, :]], axis=0)   # P0 shifted down: row h-1
        p2_up = jnp.concatenate([p2[1:, :], zrow], axis=0)        # P2 shifted up:   row h+1
        h_idx = lax.broadcasted_iota(jnp.int32, (mb, wcout), 0) % H

        out = p1 + b_ref[...]                                     # bias seeds the accumulator
        out = out + jnp.where(h_idx != 0, p0_dn, 0.0)
        out = out + jnp.where(h_idx != H - 1, p2_up, 0.0)
        o_ref[...] = out.astype(o_ref.dtype)

    return kernel


def _spectral_norm_weight(weight, u):
    """One power iteration on weight.reshape(Cout, -1); returns weight / sigma."""
    Cout = weight.shape[0]
    w_mat = weight.reshape(Cout, -1)
    v = w_mat.T @ u
    v = v / jnp.maximum(jnp.linalg.norm(v), 1e-12)
    u_new = w_mat @ v
    u_new = u_new / jnp.maximum(jnp.linalg.norm(u_new), 1e-12)
    sigma = u_new @ (w_mat @ v)
    return weight / sigma


def _banded_ky_weights(w_sn, W):
    """(Cout, Cin, 3, 3) -> (3, W*Cin, W*Cout) banded matrices B_ky with
    B[ky, q*Cin+ci, w*Cout+co] = w_sn[co, ci, ky, q-w+1] if 0 <= q-w+1 <= 2 else 0.
    x-direction zero padding is implicit: edge taps fall outside [0, W) and stay zero."""
    Cout, Cin = w_sn.shape[0], w_sn.shape[1]
    taps = jnp.transpose(w_sn, (2, 3, 1, 0)).astype(jnp.float32)   # (ky, kx, Cin, Cout)
    q = jnp.arange(W)[:, None]                                     # input column
    w = jnp.arange(W)[None, :]                                     # output column
    kx = q - w + 1                                                 # (W, W)
    valid = (kx >= 0) & (kx <= 2)
    blk = taps[:, jnp.clip(kx, 0, 2)]                              # (ky, q, w, Cin, Cout)
    blk = jnp.where(valid[None, :, :, None, None], blk, 0.0)
    # (ky, q, ci, w, co) -> (3, W*Cin, W*Cout)
    return jnp.transpose(blk, (0, 1, 3, 2, 4)).reshape(3, W * Cin, W * Cout)


def _pick_batch_block(N, H, target_rows=512):
    """Largest divisor nb of N with nb*H <= target_rows, so M = nb*H feeds the MXU with
    a tall block while the per-step x/out blocks stay comfortably inside VMEM."""
    nb = 1
    for cand in range(1, N + 1):
        if N % cand == 0 and cand * H <= target_rows:
            nb = cand
    return nb


def middle_conv(x_nchw, gamma, beta, weight, bias, u, eps=1e-3):
    """Forward of Middle_conv. x_nchw: (N, Cin, H, W) float32 -> (N, Cout, H, W)."""
    N, Cin, H, W = x_nchw.shape
    Cout = weight.shape[0]

    # --- BatchNorm2d training-mode forward: batch stats, biased variance ---
    # TODO(synk): running-stat updates (momentum=0.01) are not reproduced, and at
    # production sizes the NCHW<->NHWC transposes + this stats pass are extra HBM
    # passes; keep the surrounding model in NHWC (or use running stats) to drop them.
    x_nhwc = jnp.transpose(x_nchw, (0, 2, 3, 1)).astype(jnp.float32)
    mean = jnp.mean(x_nhwc, axis=(0, 1, 2))
    var = jnp.var(x_nhwc, axis=(0, 1, 2))
    scale = gamma / jnp.sqrt(var + eps)
    shift = beta - mean * scale

    # --- spectral_norm + per-ky banded weights (bf16 MXU operands, f32 accumulate) ---
    w_sn = _spectral_norm_weight(weight, u)                        # (Cout, Cin, 3, 3)
    w_ky = _banded_ky_weights(w_sn, W).astype(jnp.bfloat16)        # (3, W*Cin, W*Cout)
    # TODO(synk): at production W switch to an im2col (9*Cin, Cout) weight with a
    # channels-in-lanes layout so the weight stops scaling O(W^2) and the per-ky
    # matmuls stop doing ~W/3x extra MACs (mandatory for v7x's 64 MiB VMEM).

    # --- lane-dense packing: rows = N*H, lanes = W*C (same memory as NHWC) ---
    x2 = x_nhwc.reshape(N * H, W * Cin)
    scale_t = jnp.tile(scale, W).reshape(1, W * Cin).astype(jnp.float32)
    shift_t = jnp.tile(shift, W).reshape(1, W * Cin).astype(jnp.float32)
    bias_t = jnp.tile(bias, W).reshape(1, W * Cout).astype(jnp.float32)

    nb = _pick_batch_block(N, H)
    mb = nb * H

    out2 = pl.pallas_call(
        _make_kernel(H),
        out_shape=jax.ShapeDtypeStruct((N * H, W * Cout), jnp.float32),
        grid_spec=pltpu.PrefetchScalarGridSpec(
            num_scalar_prefetch=0,
            grid=(N // nb,),
            in_specs=[
                pl.BlockSpec((mb, W * Cin), lambda i: (i, 0)),
                pl.BlockSpec((1, W * Cin), lambda i: (0, 0)),
                pl.BlockSpec((1, W * Cin), lambda i: (0, 0)),
                pl.BlockSpec((3, W * Cin, W * Cout), lambda i: (0, 0, 0)),
                pl.BlockSpec((1, W * Cout), lambda i: (0, 0)),
            ],
            out_specs=pl.BlockSpec((mb, W * Cout), lambda i: (i, 0)),
        ),
        # TODO(synk): on v7x (2 TCs, 64 MiB VMEM) split rows/batch into >=2 parallel
        # grid steps when N is small, and re-budget block sizes for the smaller VMEM.
        compiler_params=pltpu.CompilerParams(
            dimension_semantics=("parallel",),
        ),
    )(x2, scale_t, shift_t, w_ky, bias_t)

    out = out2.reshape(N, H, W, Cout)                 # same memory, viewed as NHWC
    return jnp.transpose(out, (0, 3, 1, 2))           # back to NCHW


def middle_conv_reference(x_nchw, gamma, beta, weight, bias, u, eps=1e-3):
    """Pure-JAX reference (BN train-mode -> ReLU -> spectral-norm conv3x3 + bias)."""
    mean = jnp.mean(x_nchw, axis=(0, 2, 3))
    var = jnp.var(x_nchw, axis=(0, 2, 3))
    xn = (x_nchw - mean[None, :, None, None]) / jnp.sqrt(var + eps)[None, :, None, None]
    act = jnp.maximum(xn * gamma[None, :, None, None] + beta[None, :, None, None], 0.0)
    w_sn = _spectral_norm_weight(weight, u)
    out = lax.conv_general_dilated(
        act, w_sn, window_strides=(1, 1), padding=((1, 1), (1, 1)),
        dimension_numbers=("NCHW", "OIHW", "NCHW"),
        precision=lax.Precision.HIGHEST)
    return out + bias[None, :, None, None]


if __name__ == "__main__":
    N, Cin, Cout, H, W = 2, 4, 8, 16, 16

    key = jax.random.PRNGKey(0)
    kx, kg, kb, kw, kbias, ku = jax.random.split(key, 6)

    x = jax.random.normal(kx, (N, Cin, H, W), dtype=jnp.float32)

    # Deterministic synthetic parameters (shapes per the module's __init__).
    gamma = 1.0 + 0.1 * jax.random.normal(kg, (Cin,), dtype=jnp.float32)        # BN weight
    beta = 0.1 * jax.random.normal(kb, (Cin,), dtype=jnp.float32)               # BN bias
    weight = 0.1 * jax.random.normal(kw, (Cout, Cin, 3, 3), dtype=jnp.float32)  # conv weight
    bias = 0.1 * jax.random.normal(kbias, (Cout,), dtype=jnp.float32)           # conv bias
    u = jax.random.normal(ku, (Cout,), dtype=jnp.float32)                       # spectral-norm u
    u = u / jnp.linalg.norm(u)

    out = middle_conv(x, gamma, beta, weight, bias, u)
    out = jax.block_until_ready(out)

    assert out.shape == (N, Cout, H, W), out.shape
    assert bool(jnp.all(jnp.isfinite(out)))

    ref = jax.block_until_ready(middle_conv_reference(x, gamma, beta, weight, bias, u))
    # bf16 MXU operands (f32 accumulation) -> expect ~1e-2-level max abs error.
    max_err = float(jnp.max(jnp.abs(out - ref)))
    assert max_err < 3e-2, f"max abs error vs reference: {max_err}"

    print("KERNEL_OK")
</pallas_src>

<mosaic_0001>
module attributes {stable_mosaic.version = 11 : i64} {
  func.func @kernel(%arg0: i32, %arg1: memref<32x64xf32, #tpu.memory_space<vmem>>, %arg2: memref<1x64xf32, #tpu.memory_space<vmem>>, %arg3: memref<1x64xf32, #tpu.memory_space<vmem>>, %arg4: memref<3x64x128xbf16, #tpu.memory_space<vmem>>, %arg5: memref<1x128xf32, #tpu.memory_space<vmem>>, %arg6: memref<32x128xf32, #tpu.memory_space<vmem>>) attributes {dimension_semantics = [#tpu.dimension_semantics<parallel>], iteration_bounds = array<i64: 1>, scalar_prefetch = 0 : i64, scratch_operands = 0 : i64, tpu.core_type = #tpu.core_type<tc>, window_params = [{transform_indices = @transform_0, window_bounds = array<i64: 32, 64>}, {pipeline_mode = #tpu.pipeline_mode<synchronous>, transform_indices = @transform_1, window_bounds = array<i64: 1, 64>}, {pipeline_mode = #tpu.pipeline_mode<synchronous>, transform_indices = @transform_2, window_bounds = array<i64: 1, 64>}, {pipeline_mode = #tpu.pipeline_mode<synchronous>, transform_indices = @transform_3, window_bounds = array<i64: 3, 64, 128>}, {pipeline_mode = #tpu.pipeline_mode<synchronous>, transform_indices = @transform_4, window_bounds = array<i64: 1, 128>}, {transform_indices = @transform_5, window_bounds = array<i64: 32, 128>}]} {
    %c0 = arith.constant 0 : index
    %c0_0 = arith.constant 0 : index
    %0 = vector.load %arg1[%c0, %c0_0] : memref<32x64xf32, #tpu.memory_space<vmem>>, vector<32x64xf32>
    %c0_1 = arith.constant 0 : index
    %c0_2 = arith.constant 0 : index
    %1 = vector.load %arg2[%c0_1, %c0_2] : memref<1x64xf32, #tpu.memory_space<vmem>>, vector<1x64xf32>
    %2 = vector.broadcast %1 : vector<1x64xf32> to vector<32x64xf32>
    %3 = arith.mulf %0, %2 : vector<32x64xf32>
    %c0_3 = arith.constant 0 : index
    %c0_4 = arith.constant 0 : index
    %4 = vector.load %arg3[%c0_3, %c0_4] : memref<1x64xf32, #tpu.memory_space<vmem>>, vector<1x64xf32>
    %5 = vector.broadcast %4 : vector<1x64xf32> to vector<32x64xf32>
    %6 = arith.addf %3, %5 : vector<32x64xf32>
    %cst = arith.constant 0.000000e+00 : f32
    %7 = vector.broadcast %cst : f32 to vector<32x64xf32>
    %8 = arith.maximumf %6, %7 : vector<32x64xf32>
    %9 = arith.truncf %8 : vector<32x64xf32> to vector<32x64xbf16>
    %c0_5 = arith.constant 0 : index
    %c0_6 = arith.constant 0 : index
    %c0_7 = arith.constant 0 : index
    %10 = vector.load %arg4[%c0_5, %c0_6, %c0_7] : memref<3x64x128xbf16, #tpu.memory_space<vmem>>, vector<1x64x128xbf16>
    %11 = vector.shape_cast %10 : vector<1x64x128xbf16> to vector<64x128xbf16>
    %cst_8 = arith.constant dense<0.000000e+00> : vector<32x128xf32>
    %12 = tpu.matmul %9, %11, %cst_8 {dimension_numbers = #tpu.dot_dimension_numbers<[1], [0], [0], [1], [0, 0, 1, 1], [], []>} : vector<32x64xbf16>, vector<64x128xbf16>, vector<32x128xf32> -> vector<32x128xf32>
    %c1 = arith.constant 1 : index
    %c0_9 = arith.constant 0 : index
    %c0_10 = arith.constant 0 : index
    %13 = vector.load %arg4[%c1, %c0_9, %c0_10] : memref<3x64x128xbf16, #tpu.memory_space<vmem>>, vector<1x64x128xbf16>
    %14 = vector.shape_cast %13 : vector<1x64x128xbf16> to vector<64x128xbf16>
    %cst_11 = arith.constant dense<0.000000e+00> : vector<32x128xf32>
    %15 = tpu.matmul %9, %14, %cst_11 {dimension_numbers = #tpu.dot_dimension_numbers<[1], [0], [0], [1], [0, 0, 1, 1], [], []>} : vector<32x64xbf16>, vector<64x128xbf16>, vector<32x128xf32> -> vector<32x128xf32>
    %c2 = arith.constant 2 : index
    %c0_12 = arith.constant 0 : index
    %c0_13 = arith.constant 0 : index
    %16 = vector.load %arg4[%c2, %c0_12, %c0_13] : memref<3x64x128xbf16, #tpu.memory_space<vmem>>, vector<1x64x128xbf16>
    %17 = vector.shape_cast %16 : vector<1x64x128xbf16> to vector<64x128xbf16>
    %cst_14 = arith.constant dense<0.000000e+00> : vector<32x128xf32>
    %18 = tpu.matmul %9, %17, %cst_14 {dimension_numbers = #tpu.dot_dimension_numbers<[1], [0], [0], [1], [0, 0, 1, 1], [], []>} : vector<32x64xbf16>, vector<64x128xbf16>, vector<32x128xf32> -> vector<32x128xf32>
    %cst_15 = arith.constant 0.000000e+00 : f32
    %19 = vector.broadcast %cst_15 : f32 to vector<1x128xf32>
    %20 = vector.extract_strided_slice %12 {offsets = [0, 0], sizes = [31, 128], strides = [1, 1]} : vector<32x128xf32> to vector<31x128xf32>
    %21 = tpu.concatenate %19, %20 in 0 : vector<1x128xf32>, vector<31x128xf32> -> vector<32x128xf32>
    %22 = vector.extract_strided_slice %18 {offsets = [1, 0], sizes = [31, 128], strides = [1, 1]} : vector<32x128xf32> to vector<31x128xf32>
    %23 = tpu.concatenate %22, %19 in 0 : vector<31x128xf32>, vector<1x128xf32> -> vector<32x128xf32>
    %24 = tpu.iota {dimensions = array<i32: 0>} : vector<32x128xi32>
    %c16_i32 = arith.constant 16 : i32
    %c0_i32 = arith.constant 0 : i32
    %25 = arith.cmpi eq, %c16_i32, %c0_i32 : i32
    %c1_i32 = arith.constant 1 : i32
    %26 = arith.select %25, %c1_i32, %c16_i32 : i32
    %27 = vector.broadcast %26 : i32 to vector<32x128xi32>
    %28 = arith.remsi %24, %27 : vector<32x128xi32>
    %c0_i32_16 = arith.constant 0 : i32
    %29 = vector.broadcast %c0_i32_16 : i32 to vector<32x128xi32>
    %30 = arith.cmpi ne, %28, %29 : vector<32x128xi32>
    %c0_i32_17 = arith.constant 0 : i32
    %31 = vector.broadcast %c0_i32_17 : i32 to vector<32x128xi32>
    %32 = arith.cmpi slt, %28, %31 : vector<32x128xi32>
    %c0_i32_18 = arith.constant 0 : i32
    %33 = arith.cmpi slt, %26, %c0_i32_18 : i32
    %34 = vector.broadcast %33 : i1 to vector<32x128xi1>
    %35 = vector.broadcast %34 : vector<32x128xi1> to vector<32x128xi1>
    %36 = arith.xori %32, %35 : vector<32x128xi1>
    %37 = arith.andi %36, %30 : vector<32x128xi1>
    %38 = vector.broadcast %26 : i32 to vector<32x128xi32>
    %39 = arith.addi %28, %38 : vector<32x128xi32>
    %40 = arith.select %37, %39, %28 : vector<32x128xi1>, vector<32x128xi32>
    %c0_19 = arith.constant 0 : index
    %c0_20 = arith.constant 0 : index
    %41 = vector.load %arg5[%c0_19, %c0_20] : memref<1x128xf32, #tpu.memory_space<vmem>>, vector<1x128xf32>
    %42 = vector.broadcast %41 : vector<1x128xf32> to vector<32x128xf32>
    %43 = arith.addf %15, %42 : vector<32x128xf32>
    %c0_i32_21 = arith.constant 0 : i32
    %44 = vector.broadcast %c0_i32_21 : i32 to vector<32x128xi32>
    %45 = arith.cmpi ne, %40, %44 : vector<32x128xi32>
    %cst_22 = arith.constant 0.000000e+00 : f32
    %46 = vector.broadcast %cst_22 : f32 to vector<32x128xf32>
    %47 = arith.select %45, %21, %46 : vector<32x128xi1>, vector<32x128xf32>
    %48 = arith.addf %43, %47 : vector<32x128xf32>
    %c15_i32 = arith.constant 15 : i32
    %49 = vector.broadcast %c15_i32 : i32 to vector<32x128xi32>
    %50 = arith.cmpi ne, %40, %49 : vector<32x128xi32>
    %cst_23 = arith.constant 0.000000e+00 : f32
    %51 = vector.broadcast %cst_23 : f32 to vector<32x128xf32>
    %52 = arith.select %50, %23, %51 : vector<32x128xi1>, vector<32x128xf32>
    %53 = arith.addf %48, %52 : vector<32x128xf32>
    %c0_24 = arith.constant 0 : index
    %c0_25 = arith.constant 0 : index
    %54 = vector.load %arg6[%c0_24, %c0_25] : memref<32x128xf32, #tpu.memory_space<vmem>>, vector<32x128xf32>
    tpu.vector_store %arg6[%c0_24, %c0_25], %53 {strides = array<i32>} : memref<32x128xf32, #tpu.memory_space<vmem>>, vector<32x128xf32>,
    return
  }
  func.func @transform_0(%arg0: i32) -> (i32, i32) {
    %c0_i32 = arith.constant 0 : i32
    %c0_i32_0 = arith.constant 0 : i32
    return %arg0, %c0_i32 : i32, i32
  }
  func.func @transform_1(%arg0: i32) -> (i32, i32) {
    %c0_i32 = arith.constant 0 : i32
    %c0_i32_0 = arith.constant 0 : i32
    %c0_i32_1 = arith.constant 0 : i32
    return %c0_i32, %c0_i32_0 : i32, i32
  }
  func.func @transform_2(%arg0: i32) -> (i32, i32) {
    %c0_i32 = arith.constant 0 : i32
    %c0_i32_0 = arith.constant 0 : i32
    %c0_i32_1 = arith.constant 0 : i32
    return %c0_i32, %c0_i32_0 : i32, i32
  }
  func.func @transform_3(%arg0: i32) -> (i32, i32, i32) {
    %c0_i32 = arith.constant 0 : i32
    %c0_i32_0 = arith.constant 0 : i32
    %c0_i32_1 = arith.constant 0 : i32
    %c0_i32_2 = arith.constant 0 : i32
    return %c0_i32, %c0_i32_0, %c0_i32_1 : i32, i32, i32
  }
  func.func @transform_4(%arg0: i32) -> (i32, i32) {
    %c0_i32 = arith.constant 0 : i32
    %c0_i32_0 = arith.constant 0 : i32
    %c0_i32_1 = arith.constant 0 : i32
    return %c0_i32, %c0_i32_0 : i32, i32
  }
  func.func @transform_5(%arg0: i32) -> (i32, i32) {
    %c0_i32 = arith.constant 0 : i32
    %c0_i32_0 = arith.constant 0 : i32
    return %arg0, %c0_i32 : i32, i32
  }
}

</mosaic_0001>

<llo_original>
// kernel: tpu_custom_call.1
$region0: #{tpu_custom_call.1}
  #allocation0 [shape = 'u32[]', space=smem, size = 0x4, offset = 0x4, fixed_abs, tag = 'smem constant byte address 0x4 - core index']
  #allocation1 [shape = 'u32[72,128]{1,0:T(1,128)}', space=vmem, size = 0x9000, scoped, tag = 'internal scratch']
  %s0 = inlined_call_operand.hbm [shape: f32[32,64], index: 0, kind: input, shape index: {}]
  %s1 = inlined_call_operand.hbm [shape: f32[1,64], index: 1, kind: input, shape index: {}]
  %s2 = inlined_call_operand.vmem [shape: f32[1,64], index: 2, kind: input, shape index: {}]
  %s3 = inlined_call_operand.hbm [shape: bf16[3,64,128], index: 3, kind: input, shape index: {}]
  %s4 = inlined_call_operand.vmem [shape: f32[1,128], index: 4, kind: input, shape index: {}]
  %s5 = inlined_call_operand.hbm [shape: f32[32,128], index: 5, kind: output, shape index: {}]
  %s6 = sld [smem:[#allocation0]]
  $region42: #{tpu_custom_call.1} parent=0
    _
  %s8 = ssub.s32 1, %s6
  %s9 = scalar_select 0, %s8, %s6
  $region1: #{tpu_custom_call.1} parent=0
    #allocation2 [shape = 'u8[16384]{0}', space=vmem, size = 0x4000, scoped, tag = 'input window, operand 0, single buffered']
    #allocation3 [shape = 's32[1]{0}', space=sflag, size = 0x4, scoped, tag = 'scoped memory for tpu_custom_call.1']
    #allocation4 [shape = 's32[1]{0}', space=sflag, size = 0x4, scoped, tag = 'scoped memory for tpu_custom_call.1']
    #allocation5 [shape = 'u8[512]{0}', space=vmem, size = 0x400, scoped, tag = 'input window, operand 1, single buffered']
    #allocation6 [shape = 's32[1]{0}', space=sflag, size = 0x4, scoped, tag = 'scoped memory for tpu_custom_call.1']
    #allocation7 [shape = 'u8[49152]{0}', space=vmem, size = 0xc000, scoped, tag = 'input window, operand 3, single buffered']
    #allocation8 [shape = 'u8[16384]{0}', space=vmem, size = 0x4000, scoped, tag = 'output window, operand 0, single buffered']
    %10 = vsyncpa [#allocation3], 0
    %11 = vsyncpa [#allocation6], 0
    %12 = vsyncpa [#allocation4], 0
    // Predicated region
    $region2: #{tpu_custom_call.1} parent=1 // pred_check
      _
    $region3: #{tpu_custom_call.1} parent=1 // pred_check_branch
      %14 = sbr.rel (0) target = $region5
    $region4: #{tpu_custom_call.1} parent=1 // pred_region
      %16 = vsyncadd [#allocation3], 0
      %s17 = sshll.u32 %s0, 4
      %s18 = int_to_ptr.hbm [resolvable:$true] %s17
      %s19 = sshll.u32 [#allocation2], 4
      %s20 = int_to_ptr.vmem [resolvable:$true] %s19
      %25 = dma.hbm_to_vmem [thread:$0]  %s18, 512, %s20, [#allocation3], 128, 128, 8
    $region5: #{tpu_custom_call.1} parent=1 // pred_fallthru
      _
    // Predicated region
    $region6: #{tpu_custom_call.1} parent=1 // pred_check
      _
    $region7: #{tpu_custom_call.1} parent=1 // pred_check_branch
      %27 = sbr.rel (0) target = $region9
    $region8: #{tpu_custom_call.1} parent=1 // pred_region
      %29 = vsyncadd [#allocation6], 0
      %s31 = sshll.u32 %s1, 4
      %s32 = int_to_ptr.hbm [resolvable:$true] %s31
      %s33 = sshll.u32 [#allocation5], 4
      %s34 = int_to_ptr.vmem [resolvable:$true] %s33
      %36 = dma.hbm_to_vmem [thread:$0]  %s32, 16, %s34, [#allocation6]
    $region9: #{tpu_custom_call.1} parent=1 // pred_fallthru
      _
    // Predicated region
    $region10: #{tpu_custom_call.1} parent=1 // pred_check
      _
    $region11: #{tpu_custom_call.1} parent=1 // pred_check_branch
      %38 = sbr.rel (0) target = $region13
    $region12: #{tpu_custom_call.1} parent=1 // pred_region
      _
    $region13: #{tpu_custom_call.1} parent=1 // pred_fallthru
      _
    // Predicated region
    $region14: #{tpu_custom_call.1} parent=1 // pred_check
      _
    $region15: #{tpu_custom_call.1} parent=1 // pred_check_branch
      %40 = sbr.rel (0) target = $region17
    $region16: #{tpu_custom_call.1} parent=1 // pred_region
      %42 = vsyncadd [#allocation6], 0
      %s43 = sshll.u32 %s3, 4
      %s44 = int_to_ptr.hbm [resolvable:$true] %s43
      %s45 = sshll.u32 [#allocation7], 4
      %s46 = int_to_ptr.vmem [resolvable:$true] %s45
      %51 = dma.hbm_to_vmem [thread:$0]  %s44, 1536, %s46, [#allocation6], 64, 64, 4
    $region17: #{tpu_custom_call.1} parent=1 // pred_fallthru
      _
    // Predicated region
    $region18: #{tpu_custom_call.1} parent=1 // pred_check
      _
    $region19: #{tpu_custom_call.1} parent=1 // pred_check_branch
      %53 = sbr.rel (0) target = $region21
    $region20: #{tpu_custom_call.1} parent=1 // pred_region
      _
    $region21: #{tpu_custom_call.1} parent=1 // pred_fallthru
      _
    // Predicated region
    $region22: #{tpu_custom_call.1} parent=1 // pred_check
      _
    $region23: #{tpu_custom_call.1} parent=1 // pred_check_branch
      %55 = sbr.rel (0) target = $region25
    $region24: #{tpu_custom_call.1} parent=1 // pred_region
      %57 = dma.done [#allocation3], 512
    $region25: #{tpu_custom_call.1} parent=1 // pred_fallthru
      _
    // Predicated region
    $region26: #{tpu_custom_call.1} parent=1 // pred_check
      _
    $region27: #{tpu_custom_call.1} parent=1 // pred_check_branch
      %59 = sbr.rel (0) target = $region29
    $region28: #{tpu_custom_call.1} parent=1 // pred_region
      %61 = dma.done [#allocation6], 16
    $region29: #{tpu_custom_call.1} parent=1 // pred_fallthru
      _
    // Predicated region
    $region30: #{tpu_custom_call.1} parent=1 // pred_check
      _
    $region31: #{tpu_custom_call.1} parent=1 // pred_check_branch
      %63 = sbr.rel (0) target = $region33
    $region32: #{tpu_custom_call.1} parent=1 // pred_region
      %65 = dma.done [#allocation6], 1536
    $region33: #{tpu_custom_call.1} parent=1 // pred_fallthru
      _
    %v67 = vld [vmem:[#allocation2] sm:$0xff]
    %v68 = vld [vmem:[#allocation2 + $0x8] sm:$0xff]
    %v69 = vld [vmem:[#allocation2 + $0x10] sm:$0xff]
    %v70 = vld [vmem:[#allocation2 + $0x18] sm:$0xff]
    %v71 = vld [vmem:[#allocation5] sm:$0x1]
    %v73 = vperm.slane %v71, 0
    %v75 = vmul.f32 %v67, %v73
    %v76 = vmul.f32 %v68, %v73
    %v77 = vmul.f32 %v69, %v73
    %v78 = vmul.f32 %v70, %v73
    %v79 = vld [vmem:[%s2] sm:$0x1]
    %v81 = vperm.slane %v79, 0
    %v83 = vadd.f32 %v75, %v81
    %v84 = vadd.f32 %v76, %v81
    %v85 = vadd.f32 %v77, %v81
    %v86 = vadd.f32 %v78, %v81
    %v87 = vmax.f32 %v83, 0.0
    %v88 = vmax.f32 %v84, 0.0
    %v89 = vmax.f32 %v85, 0.0
    %v90 = vmax.f32 %v86, 0.0
    %v91 = vpack.c.bf16 %v88, %v87
    %v92 = vpack.c.bf16 %v90, %v89
    %v93 = vld [vmem:[#allocation7] sm:$0xf]
    %v94 = vld [vmem:[#allocation7 + $0x4] sm:$0xf]
    %v95 = vld [vmem:[#allocation7 + $0x8] sm:$0xf]
    %v96 = vld [vmem:[#allocation7 + $0xc] sm:$0xf]
    %v97 = vld [vmem:[#allocation7 + $0x10] sm:$0xf]
    %v98 = vld [vmem:[#allocation7 + $0x14] sm:$0xf]
    %v99 = vld [vmem:[#allocation7 + $0x18] sm:$0xf]
    %v100 = vld [vmem:[#allocation7 + $0x1c] sm:$0xf]
    %v109 = vunpack.c.l.b16 %v93
    %v110 = vunpack.c.l.b16 %v94
    %v111 = vunpack.c.l.b16 %v95
    %v112 = vunpack.c.l.b16 %v96
    %v113 = vunpack.c.l.b16 %v97
    %v114 = vunpack.c.l.b16 %v98
    %v115 = vunpack.c.l.b16 %v99
    %v116 = vunpack.c.l.b16 %v100
    %v117 = vpack.c.b16 %v110, %v109
    %v118 = vpack.c.b16 %v112, %v111
    %v119 = vpack.c.b16 %v114, %v113
    %v120 = vpack.c.b16 %v116, %v115
    %vm125 = vcmask 523264
    %v127 = vsel %vm125, %v91, 0
    %v130 = vsel %vm125, %v92, 0
    %132 = vmatpush.bf16.msra.mxu0 0
    %133 = vmatpush.bf16.msra.mxu0 0
    %134 = vmatpush.bf16.msra.mxu0 0
    %135 = vmatpush.bf16.msra.mxu0 0
    %136 = vmatpush.bf16.msra.mxu0 %v120
    %137 = vmatpush.bf16.msra.mxu0 %v119
    %138 = vmatpush.bf16.msra.mxu0 %v118
    %139 = vmatpush.bf16.msra.mxu0 %v117
    %140 = vmatmul.bf16.gmra.mxu0 %v127
    %v141 = vpop.f32.mrf.mxu0
    %v142 = vadd.f32 0.0, %v141
    %v143 = vpop.f32.mrf.mxu0
    %v144 = vadd.f32 0.0, %v143
    %145 = vmatmul.bf16.gmra.mxu0 %v130
    %v146 = vpop.f32.mrf.mxu0
    %v147 = vadd.f32 0.0, %v146
    %v148 = vpop.f32.mrf.mxu0
    %v149 = vadd.f32 0.0, %v148
    %150 = vdwg.mxu0
    %s151 = scalar_lea.vmem [#allocation7], 32
    %v152 = vld [vmem:[%s151] sm:$0xf]
    %v153 = vld [vmem:[%s151 + $0x4] sm:$0xf]
    %v154 = vld [vmem:[%s151 + $0x8] sm:$0xf]
    %v155 = vld [vmem:[%s151 + $0xc] sm:$0xf]
    %v156 = vld [vmem:[%s151 + $0x10] sm:$0xf]
    %v157 = vld [vmem:[%s151 + $0x14] sm:$0xf]
    %v158 = vld [vmem:[%s151 + $0x18] sm:$0xf]
    %v159 = vld [vmem:[%s151 + $0x1c] sm:$0xf]
    %s160 = scalar_lea.vmem [#allocation7], 64
    %v161 = vld [vmem:[%s160] sm:$0xf]
    %v162 = vld [vmem:[%s160 + $0x4] sm:$0xf]
    %v163 = vld [vmem:[%s160 + $0x8] sm:$0xf]
    %v164 = vld [vmem:[%s160 + $0xc] sm:$0xf]
    %v165 = vld [vmem:[%s160 + $0x10] sm:$0xf]
    %v166 = vld [vmem:[%s160 + $0x14] sm:$0xf]
    %v167 = vld [vmem:[%s160 + $0x18] sm:$0xf]
    %v168 = vld [vmem:[%s160 + $0x1c] sm:$0xf]
    %v177 = vunpack.c.l.b16 %v161
    %v178 = vunpack.c.l.b16 %v162
    %v179 = vunpack.c.l.b16 %v163
    %v180 = vunpack.c.l.b16 %v164
    %v181 = vunpack.c.l.b16 %v165
    %v182 = vunpack.c.l.b16 %v166
    %v183 = vunpack.c.l.b16 %v167
    %v184 = vunpack.c.l.b16 %v168
    %v185 = vpack.c.b16 %v178, %v177
    %v186 = vpack.c.b16 %v180, %v179
    %v187 = vpack.c.b16 %v182, %v181
    %v188 = vpack.c.b16 %v184, %v183
    %193 = vmatpush.bf16.msra.mxu0 0
    %194 = vmatpush.bf16.msra.mxu0 0
    %195 = vmatpush.bf16.msra.mxu0 0
    %196 = vmatpush.bf16.msra.mxu0 0
    %197 = vmatpush.bf16.msra.mxu0 %v188
    %198 = vmatpush.bf16.msra.mxu0 %v187
    %199 = vmatpush.bf16.msra.mxu0 %v186
    %200 = vmatpush.bf16.msra.mxu0 %v185
    %201 = vmatmul.bf16.gmra.mxu0 %v127
    %v202 = vpop.f32.mrf.mxu0
    %v203 = vadd.f32 0.0, %v202
    %v204 = vpop.f32.mrf.mxu0
    %v205 = vadd.f32 0.0, %v204
    %206 = vmatmul.bf16.gmra.mxu0 %v130
    %v207 = vpop.f32.mrf.mxu0
    %v208 = vadd.f32 0.0, %v207
    %v209 = vpop.f32.mrf.mxu0
    %v210 = vadd.f32 0.0, %v209
    %211 = vdwg.mxu0
    %vm216 = vcmask 1040384
    %v217 = vrot.slane %v142, 7
    %v218 = vrot.slane %v144, 7
    %v219 = vsel %vm216, %v217, %v218
    %v220 = vrot.slane %v147, 7
    %v221 = vsel %vm216, %v218, %v220
    %v222 = vrot.slane %v149, 7
    %v223 = vsel %vm216, %v220, %v222
    %v228 = vsel %vm216, 0.0, %v217
    %vm233 = vcmask 1046528
    %v234 = vrot.slane %v203, 1
    %v235 = vrot.slane %v205, 1
    %v236 = vsel %vm233, %v234, %v235
    %v237 = vrot.slane %v208, 1
    %v238 = vsel %vm233, %v235, %v237
    %v239 = vrot.slane %v210, 1
    %v240 = vsel %vm233, %v237, %v239
    %v245 = vsel %vm233, %v239, 0.0
    %v246 = vlaneseq
    %v247 = vshrl.u32 %v246, 7
    %v248 = vadd.s32 %v247, 8
    %v249 = vadd.s32 %v247, 16
    %v250 = vadd.s32 %v247, 24
    %vm251 = vcmp.lt.s32.totalorder %v247, 0
    %v252 = vsub.s32 0, %v247
    %v253 = vsel %vm251, %v252, %v247
    %v254 = vshrl.u32 %v253, 4
    %v255 = vand.u32 %v253, 15
    %v256 = vsub.s32 0, %v255
    %v257 = vsel %vm251, %v256, %v255
    %vm258 = vcmp.lt.s32.totalorder %v248, 0
    %v259 = vsub.s32 0, %v248
    %v260 = vsel %vm258, %v259, %v248
    %v261 = vshrl.u32 %v260, 4
    %v262 = vand.u32 %v260, 15
    %v263 = vsub.s32 0, %v262
    %v264 = vsel %vm258, %v263, %v262
    %vm265 = vcmp.lt.s32.totalorder %v249, 0
    %v266 = vsub.s32 0, %v249
    %v267 = vsel %vm265, %v266, %v249
    %v268 = vshrl.u32 %v267, 4
    %v269 = vand.u32 %v267, 15
    %v270 = vsub.s32 0, %v269
    %v271 = vsel %vm265, %v270, %v269
    %vm272 = vcmp.lt.s32.totalorder %v250, 0
    %v273 = vsub.s32 0, %v250
    %v274 = vsel %vm272, %v273, %v250
    %v275 = vshrl.u32 %v274, 4
    %v276 = vand.u32 %v274, 15
    %v277 = vsub.s32 0, %v276
    %v278 = vsel %vm272, %v277, %v276
    %vm279 = vcmp.ne.s32.totalorder %v257, 0
    %vm280 = vcmp.ne.s32.totalorder %v264, 0
    %vm281 = vcmp.ne.s32.totalorder %v271, 0
    %vm282 = vcmp.ne.s32.totalorder %v278, 0
    %vm283 = vcmp.lt.s32.totalorder %v257, 0
    %vm284 = vcmp.lt.s32.totalorder %v264, 0
    %vm285 = vcmp.lt.s32.totalorder %v271, 0
    %vm286 = vcmp.lt.s32.totalorder %v278, 0
    %vm287 = vmand %vm283, %vm279
    %vm288 = vmand %vm284, %vm280
    %vm289 = vmand %vm285, %vm281
    %vm290 = vmand %vm286, %vm282
    %v291 = vadd.s32 %v257, 16
    %v292 = vadd.s32 %v264, 16
    %v293 = vadd.s32 %v271, 16
    %v294 = vadd.s32 %v278, 16
    %v295 = vsel %vm287, %v291, %v257
    %v296 = vsel %vm288, %v292, %v264
    %v297 = vsel %vm289, %v293, %v271
    %v298 = vsel %vm290, %v294, %v278
    %v299 = vld [vmem:[%s4] sm:$0x1]
    %v301 = vperm.slane %v299, 0
    %v311 = vunpack.c.l.b16 %v152
    %v312 = vunpack.c.l.b16 %v153
    %v313 = vunpack.c.l.b16 %v154
    %v314 = vunpack.c.l.b16 %v155
    %v315 = vunpack.c.l.b16 %v156
    %v316 = vunpack.c.l.b16 %v157
    %v317 = vunpack.c.l.b16 %v158
    %v318 = vunpack.c.l.b16 %v159
    %v319 = vpack.c.b16 %v312, %v311
    %v320 = vpack.c.b16 %v314, %v313
    %v321 = vpack.c.b16 %v316, %v315
    %v322 = vpack.c.b16 %v318, %v317
    %327 = vmatpush.bf16.msra.mxu0 0
    %328 = vmatpush.bf16.msra.mxu0 0
    %329 = vmatpush.bf16.msra.mxu0 0
    %330 = vmatpush.bf16.msra.mxu0 0
    %331 = vmatpush.bf16.msra.mxu0 %v322
    %332 = vmatpush.bf16.msra.mxu0 %v321
    %333 = vmatpush.bf16.msra.mxu0 %v320
    %334 = vmatpush.bf16.msra.mxu0 %v319
    %335 = vmatmul.bf16.gmra.mxu0 %v127
    %v336 = vpop.f32.mrf.mxu0
    %v337 = vadd.f32 %v301, %v336
    %v338 = vpop.f32.mrf.mxu0
    %v339 = vadd.f32 %v301, %v338
    %340 = vmatmul.bf16.gmra.mxu0 %v130
    %v341 = vpop.f32.mrf.mxu0
    %v342 = vadd.f32 %v301, %v341
    %v343 = vpop.f32.mrf.mxu0
    %v344 = vadd.f32 %v301, %v343
    %345 = vdwg.mxu0
    %vm346 = vcmp.ne.s32.totalorder %v295, 0
    %vm347 = vcmp.ne.s32.totalorder %v296, 0
    %vm348 = vcmp.ne.s32.totalorder %v297, 0
    %vm349 = vcmp.ne.s32.totalorder %v298, 0
    %v350 = vsel %vm346, %v228, 0.0
    %v351 = vsel %vm347, %v219, 0.0
    %v352 = vsel %vm348, %v221, 0.0
    %v353 = vsel %vm349, %v223, 0.0
    %v354 = vadd.f32 %v337, %v350
    %v355 = vadd.f32 %v339, %v351
    %v356 = vadd.f32 %v342, %v352
    %v357 = vadd.f32 %v344, %v353
    %vm358 = vcmp.ne.s32.totalorder %v295, 15
    %vm359 = vcmp.ne.s32.totalorder %v296, 15
    %vm360 = vcmp.ne.s32.totalorder %v297, 15
    %vm361 = vcmp.ne.s32.totalorder %v298, 15
    %v362 = vsel %vm358, %v236, 0.0
    %v363 = vsel %vm359, %v238, 0.0
    %v364 = vsel %vm360, %v240, 0.0
    %v365 = vsel %vm361, %v245, 0.0
    %v366 = vadd.f32 %v354, %v362
    %v367 = vadd.f32 %v355, %v363
    %v368 = vadd.f32 %v356, %v364
    %v369 = vadd.f32 %v357, %v365
    %370 = vst [vmem:[#allocation8] sm:$0xff] %v366
    %371 = vst [vmem:[#allocation8 + $0x8] sm:$0xff] %v367
    %372 = vst [vmem:[#allocation8 + $0x10] sm:$0xff] %v368
    %373 = vst [vmem:[#allocation8 + $0x18] sm:$0xff] %v369
    // Predicated region
    $region34: #{tpu_custom_call.1} parent=1 // pred_check
      _
    $region35: #{tpu_custom_call.1} parent=1 // pred_check_branch
      %375 = sbr.rel (0) target = $region37
    $region36: #{tpu_custom_call.1} parent=1 // pred_region
      %377 = vsyncadd [#allocation4], 0
      %s378 = sshll.u32 [#allocation8], 4
      %s379 = int_to_ptr.vmem [resolvable:$true] %s378
      %s380 = sshll.u32 %s5, 4
      %s381 = int_to_ptr.hbm [resolvable:$true] %s380
      %386 = dma.vmem_to_hbm [thread:$0]  %s379, 512, %s381, [#allocation4], 128, 128, 8
    $region37: #{tpu_custom_call.1} parent=1 // pred_fallthru
      _
    // Predicated region
    $region38: #{tpu_custom_call.1} parent=1 // pred_check
      _
    $region39: #{tpu_custom_call.1} parent=1 // pred_check_branch
      %388 = sbr.rel (0) target = $region41
    $region40: #{tpu_custom_call.1} parent=1 // pred_region
      %390 = dma.done [#allocation4], 512
    $region41: #{tpu_custom_call.1} parent=1 // pred_fallthru
      _
    %391 = vsyncpa [#allocation3], 1
    %392 = vsyncpa [#allocation6], 1
    %393 = vsyncpa [#allocation4], 1

</llo_original>
